<compile_context>
chip_gen: v7x
topology: tpu7x:2x2x1
jax: 0.10.0
libtpu: 0.0.40
codegen_flags: <defaults>
</compile_context>

<pallas_src>
import jax
import jax.numpy as jnp
from jax.experimental import pallas as pl
from jax.experimental.pallas import tpu as pltpu


_LANE = 128                       # minimum lane-dense width
_WIDE_LANE = 1024                 # preferred lane width for large flat inputs
_BLOCK_BYTES = 4 * 1024 * 1024    # per-block VMEM budget (x + out, double-buffered)


def _mymul_kernel(w_ref, x_ref, o_ref):
    # w_ref: (1,) f32 in SMEM (scalar prefetch).  x_ref/o_ref: (tb, lane) VMEM tiles.
    w = jnp.abs(w_ref[0]).astype(x_ref.dtype)     # scalar-unit abs, no tile promotion
    o_ref[...] = x_ref[...] * w


def _run(x2d, w1d, tb, out_dtype, bytes_accessed):
    rows, lane = x2d.shape
    grid = (pl.cdiv(rows, tb),)
    return pl.pallas_call(
        _mymul_kernel,
        out_shape=jax.ShapeDtypeStruct((rows, lane), out_dtype),
        grid_spec=pltpu.PrefetchScalarGridSpec(
            num_scalar_prefetch=1,                          # weight -> SMEM
            grid=grid,
            in_specs=[pl.BlockSpec((tb, lane), lambda i, w: (i, 0))],
            out_specs=pl.BlockSpec((tb, lane), lambda i, w: (i, 0)),
        ),
        compiler_params=pltpu.CompilerParams(
            dimension_semantics=("parallel",),              # megacore split on v7x
        ),
        cost_estimate=pl.CostEstimate(
            flops=rows * lane,
            transcendentals=0,
            bytes_accessed=bytes_accessed,
        ),
    )(w1d, x2d)


def mymul(x: jax.Array, weight: jax.Array) -> jax.Array:
    """x * |weight|, weight is a scalar parameter (shape (1,) or ())."""
    orig_shape = x.shape
    dtype = x.dtype
    n = x.size
    if n == 0:
        return x

    itemsize = jnp.dtype(dtype).itemsize
    # Sublane alignment: 8 for 32-bit, 16 for 16-bit, 32 for 8-bit dtypes.
    sub = 8 if itemsize >= 4 else (16 if itemsize == 2 else 32)

    w1d = jnp.asarray(weight).reshape(1).astype(jnp.float32)

    fast = (
        x.ndim >= 2
        and orig_shape[-1] % _LANE == 0
        and (n // orig_shape[-1]) % sub == 0
        and orig_shape[-1] * itemsize <= _BLOCK_BYTES
    )

    if fast:
        # Lane-dense already: collapse leading dims, no padding / extra copies.
        lane = orig_shape[-1]
        rows = n // lane
        x2d = x.reshape(rows, lane)
    else:
        # Flatten, pad to a lane-dense (rows, lane) slab.
        lane = _WIDE_LANE if n >= _WIDE_LANE * sub else _LANE
        rows = pl.cdiv(n, lane)
        rows = pl.cdiv(rows, sub) * sub
        padded = rows * lane
        x_flat = x.reshape(-1)
        if padded != n:
            x_flat = jnp.pad(x_flat, (0, padded - n))
        x2d = x_flat.reshape(rows, lane)

    # Rows per block: as large as possible under the VMEM budget, sublane aligned.
    max_tb = max(sub, (_BLOCK_BYTES // (lane * itemsize)) // sub * sub)
    if rows <= sub:
        tb = rows                                   # block == full array extent
    else:
        tb = min(max_tb, pl.cdiv(rows, sub) * sub)

    bytes_accessed = 2 * n * itemsize
    out2d = _run(x2d, w1d, tb, dtype, bytes_accessed)

    if fast:
        return out2d.reshape(orig_shape)
    return out2d.reshape(-1)[:n].reshape(orig_shape)


if __name__ == "__main__":
    key = jax.random.PRNGKey(0)
    kx, kw = jax.random.split(key)

    # FCNet operates on flattened (batch, hidden) activations.
    batch, hidden = 2, 32
    x = jax.random.normal(kx, (batch, hidden), dtype=jnp.float32)
    # nn.Parameter(torch.rand(1)) -> uniform [0, 1) scalar, deterministic here.
    weight = jax.random.uniform(kw, (1,), dtype=jnp.float32)

    out = jax.block_until_ready(mymul(x, weight))
    ref = x * jnp.abs(weight[0])
    assert out.shape == x.shape and out.dtype == x.dtype
    assert jnp.allclose(out, ref, atol=1e-6, rtol=1e-6), "mismatch vs reference (padded path)"

    # Exercise the lane-dense fast path too (last dim multiple of 128).
    x2 = jax.random.normal(kx, (2, 8, 128), dtype=jnp.float32)
    out2 = jax.block_until_ready(mymul(x2, weight))
    ref2 = x2 * jnp.abs(weight[0])
    assert out2.shape == x2.shape and out2.dtype == x2.dtype
    assert jnp.allclose(out2, ref2, atol=1e-6, rtol=1e-6), "mismatch vs reference (fast path)"

    print("KERNEL_OK")
</pallas_src>

<mosaic_0001>
module attributes {stable_mosaic.version = 11 : i64} {
  func.func @_mymul_kernel(%arg0: i32, %arg1: memref<1xf32, #tpu.memory_space<smem>>, %arg2: memref<8x128xf32, #tpu.memory_space<vmem>>, %arg3: memref<8x128xf32, #tpu.memory_space<vmem>>) attributes {dimension_semantics = [#tpu.dimension_semantics<parallel>], iteration_bounds = array<i64: 1>, scalar_prefetch = 1 : i64, scratch_operands = 0 : i64, tpu.core_type = #tpu.core_type<tc>, window_params = [{transform_indices = @transform_0, window_bounds = array<i64: 8, 128>}, {transform_indices = @transform_1, window_bounds = array<i64: 8, 128>}]} {
    %c0 = arith.constant 0 : index
    %0 = memref.load %arg1[%c0] : memref<1xf32, #tpu.memory_space<smem>>
    %1 = math.absf %0 : f32
    %c0_0 = arith.constant 0 : index
    %c0_1 = arith.constant 0 : index
    %2 = vector.load %arg2[%c0_0, %c0_1] : memref<8x128xf32, #tpu.memory_space<vmem>>, vector<8x128xf32>
    %3 = vector.broadcast %1 : f32 to vector<8x128xf32>
    %4 = arith.mulf %2, %3 : vector<8x128xf32>
    %c0_2 = arith.constant 0 : index
    %c0_3 = arith.constant 0 : index
    %5 = vector.load %arg3[%c0_2, %c0_3] : memref<8x128xf32, #tpu.memory_space<vmem>>, vector<8x128xf32>
    tpu.vector_store %arg3[%c0_2, %c0_3], %4 {strides = array<i32>} : memref<8x128xf32, #tpu.memory_space<vmem>>, vector<8x128xf32>,
    return
  }
  func.func @transform_0(%arg0: i32, %arg1: memref<1xf32, #tpu.memory_space<smem>>) -> (i32, i32) {
    %c0_i32 = arith.constant 0 : i32
    %c0_i32_0 = arith.constant 0 : i32
    return %arg0, %c0_i32 : i32, i32
  }
  func.func @transform_1(%arg0: i32, %arg1: memref<1xf32, #tpu.memory_space<smem>>) -> (i32, i32) {
    %c0_i32 = arith.constant 0 : i32
    %c0_i32_0 = arith.constant 0 : i32
    return %arg0, %c0_i32 : i32, i32
  }
}

</mosaic_0001>

<llo_original>
// kernel: tpu_custom_call.1
$region0: #{tpu_custom_call.1}
  #allocation0 [shape = 'u32[]', space=smem, size = 0x4, offset = 0x4, fixed_abs, tag = 'smem constant byte address 0x4 - core index']
  #allocation1 [shape = 'u32[144,128]{1,0:T(1,128)}', space=vmem, size = 0x12000, scoped, tag = 'internal scratch']
  #allocation2 [shape = 's32[1]{0}', space=sflag, size = 0x4, scoped, tag = 'scoped memory for tpu_custom_call.1']
  #allocation3 [shape = 'f32[1]{0:T(128)S(6)}', space=smem, size = 0x200, scoped, tag = 'prefetched SMEM operand 0']
  %s0 = inlined_call_operand.<no memory space> [shape: f32[1], index: 0, kind: input, shape index: {}]
  %s1 = inlined_call_operand.hbm [shape: f32[8,128], index: 1, kind: input, shape index: {}]
  %s2 = inlined_call_operand.hbm [shape: f32[8,128], index: 2, kind: output, shape index: {}]
  %s3 = sld [smem:[#allocation0]]
  $region18: #{tpu_custom_call.1} parent=0
    _
  %s5 = ssub.s32 1, %s3
  %s6 = scalar_select 0, %s5, %s3
  %7 = sst [smem:[#allocation3]] %s0
  $region1: #{tpu_custom_call.1} parent=0
    #allocation4 [shape = 'u8[4096]{0}', space=vmem, size = 0x1000, scoped, tag = 'input window, operand 1, single buffered']
    #allocation5 [shape = 's32[1]{0}', space=sflag, size = 0x4, scoped, tag = 'scoped memory for tpu_custom_call.1']
    #allocation6 [shape = 's32[1]{0}', space=sflag, size = 0x4, scoped, tag = 'scoped memory for tpu_custom_call.1']
    #allocation7 [shape = 'u8[4096]{0}', space=vmem, size = 0x1000, scoped, tag = 'output window, operand 0, single buffered']
    %8 = vsyncpa [#allocation5], 0
    %9 = vsyncpa [#allocation6], 0
    // Predicated region
    $region2: #{tpu_custom_call.1} parent=1 // pred_check
      _
    $region3: #{tpu_custom_call.1} parent=1 // pred_check_branch
      %11 = sbr.rel (0) target = $region5
    $region4: #{tpu_custom_call.1} parent=1 // pred_region
      %s13 = ssub.s32 128, 128
      %14 = vsyncadd [#allocation5], %s13
      %s16 = sshll.u32 [#allocation4], 4
      %s17 = int_to_ptr.vmem [resolvable:$true] %s16
      %19 = dma.hbm_to_vmem [thread:$0]  %s1, 128, %s17, [#allocation5]
    $region5: #{tpu_custom_call.1} parent=1 // pred_fallthru
      _
    // Predicated region
    $region6: #{tpu_custom_call.1} parent=1 // pred_check
      _
    $region7: #{tpu_custom_call.1} parent=1 // pred_check_branch
      %21 = sbr.rel (0) target = $region9
    $region8: #{tpu_custom_call.1} parent=1 // pred_region
      %22 = dma.done [#allocation5], 128
    $region9: #{tpu_custom_call.1} parent=1 // pred_fallthru
      _
    %s23 = sld [smem:[#allocation3]]
    %s24 = sand.u32 2147483647, %s23
    %v25 = vld [vmem:[#allocation4] sm:$0xff]
    %v26 = vstv %s24
    %v27 = vmul.f32 %v25, %v26
    %28 = vst [vmem:[#allocation7] sm:$0xff] %v27
    // Predicated region
    $region10: #{tpu_custom_call.1} parent=1 // pred_check
      _
    $region11: #{tpu_custom_call.1} parent=1 // pred_check_branch
      %30 = sbr.rel (0) target = $region13
    $region12: #{tpu_custom_call.1} parent=1 // pred_region
      %s32 = ssub.s32 128, 128
      %33 = vsyncadd [#allocation6], %s32
      %s35 = sshll.u32 [#allocation7], 4
      %s36 = int_to_ptr.vmem [resolvable:$true] %s35
      %38 = dma.vmem_to_hbm [thread:$0]  %s36, 128, %s2, [#allocation6]
    $region13: #{tpu_custom_call.1} parent=1 // pred_fallthru
      _
    // Predicated region
    $region14: #{tpu_custom_call.1} parent=1 // pred_check
      _
    $region15: #{tpu_custom_call.1} parent=1 // pred_check_branch
      %40 = sbr.rel (0) target = $region17
    $region16: #{tpu_custom_call.1} parent=1 // pred_region
      %41 = dma.done [#allocation6], 128
    $region17: #{tpu_custom_call.1} parent=1 // pred_fallthru
      _
    %42 = vsyncpa [#allocation5], 1
    %43 = vsyncpa [#allocation6], 1

</llo_original>
